<compile_context>
chip_gen: v6e
topology: v6e:2x2x1
jax: 0.10.0
libtpu: 0.0.40
codegen_flags: <defaults>
</compile_context>

<pallas_src>
import functools

import jax
import jax.numpy as jnp
from jax.experimental import pallas as pl
from jax.experimental.pallas import tpu as pltpu


# ------------------------------- helpers -----------------------------------

def _round_up(x, m):
    return (x + m - 1) // m * m


def _choose_tm(rows, target=1024):
    """Row tile.

    Small row counts -> one full (padded-to-8) tile.  Larger row counts ->
    at least 2 tiles of a 128-multiple (lane-dense critic output, and a
    >=2-tile grid so dimension_semantics=('parallel',) can shard across the
    two TensorCores on v7x), capped at `target`.
    """
    rows8 = _round_up(rows, 8)
    if rows8 <= 512:
        return rows8                                   # single tile == full padded array
    half = _round_up(pl.cdiv(rows8, 2), 128)
    return min(target, half)


_VMEM_WHOLE = pl.BlockSpec(memory_space=pltpu.MemorySpace.VMEM)   # resident param
_SMEM_WHOLE = pl.BlockSpec(memory_space=pltpu.MemorySpace.SMEM)   # scalar param


# ----------------------------- Pallas kernel --------------------------------

def _fused_actor_critic_kernel(ids_a_ref, mask_a_ref, ids_c_ref, mask_c_ref,
                               a_ew1_ref, a_b1_ref, a_w2_ref, a_b2_ref,
                               c_ew1_ref, c_b1_ref, c_wv_ref, c_bv_ref,
                               logits_ref, values_ref):
    """Per row tile:
         actor : logits = gelu(masked_onehot @ (E@W1) + b1) @ W2 + b2
         critic: v      = wv @ gelu(masked_onehot @ (E@W1) + b1)^T + bv   (lane-dense (1, tm))
    """
    tm = ids_a_ref.shape[0]
    va = a_ew1_ref.shape[0]
    vc = c_ew1_ref.shape[0]

    # ------------------------------ actor ------------------------------
    lane_a = jax.lax.broadcasted_iota(jnp.int32, (tm, va), 1)
    # mask is a per-row 0/1 scalar -> folding it into the one-hot is exact,
    # and the bf16 cast of {0, 1} is exact.
    oh_a = jnp.where(ids_a_ref[...] == lane_a, mask_a_ref[...], 0.0).astype(jnp.bfloat16)
    h_a = jnp.dot(oh_a, a_ew1_ref[...],
                  preferred_element_type=jnp.float32) + a_b1_ref[...]
    h_a = jax.nn.gelu(h_a, approximate=True)                       # f32 (v5e-safe)
    logits = jnp.dot(h_a.astype(jnp.bfloat16), a_w2_ref[...],
                     preferred_element_type=jnp.float32) + a_b2_ref[...]
    logits_ref[...] = logits.astype(logits_ref.dtype)               # bf16 writeback

    # ------------------------------ critic -----------------------------
    lane_c = jax.lax.broadcasted_iota(jnp.int32, (tm, vc), 1)
    oh_c = jnp.where(ids_c_ref[...] == lane_c, mask_c_ref[...], 0.0).astype(jnp.bfloat16)
    h_c = jnp.dot(oh_c, c_ew1_ref[...],
                  preferred_element_type=jnp.float32) + c_b1_ref[...]
    h_c = jax.nn.gelu(h_c, approximate=True)                        # (tm, F) f32
    # lane-dense value projection: (1, F) x (tm, F)^T -> (1, tm), rows on lanes
    v = jax.lax.dot_general(
        c_wv_ref[...], h_c.astype(jnp.bfloat16),
        dimension_numbers=(((1,), (1,)), ((), ())),
        preferred_element_type=jnp.float32)
    values_ref[...] = (v + c_bv_ref[0, 0]).astype(values_ref.dtype)


# --------------------------- fully-jitted forward ----------------------------

@functools.partial(jax.jit, static_argnames=("action_len_actor", "action_len_critic"))
def _actor_critic_forward(params, seq_a, mask_a, seq_c, mask_c,
                          *, action_len_actor, action_len_critic):
    (a_ew1, a_b1, a_w2, a_b2, c_ew1, c_b1, c_wv, c_bv) = params
    ba, sa = seq_a.shape
    bc, sc = seq_c.shape
    va = a_ew1.shape[0]
    vc = c_ew1.shape[0]
    rows_a, rows_c = ba * sa, bc * sc

    tm = _choose_tm(max(rows_a, rows_c))
    rows_p = _round_up(max(rows_a, rows_c), tm)

    def pad(x, rows, dtype):
        x = x.reshape(rows, 1).astype(dtype)
        return jnp.pad(x, ((0, rows_p - rows), (0, 0)))

    ids_a = pad(seq_a, rows_a, jnp.int32)
    m_a = pad(mask_a, rows_a, jnp.float32)
    ids_c = pad(seq_c, rows_c, jnp.int32)
    m_c = pad(mask_c, rows_c, jnp.float32)

    row_block = lambda i: (i, 0)

    logits_p, values_p = pl.pallas_call(
        _fused_actor_critic_kernel,
        out_shape=(jax.ShapeDtypeStruct((rows_p, va), jnp.bfloat16),
                   jax.ShapeDtypeStruct((1, rows_p), jnp.float32)),
        grid_spec=pltpu.PrefetchScalarGridSpec(
            num_scalar_prefetch=0,
            grid=(rows_p // tm,),
            in_specs=[
                pl.BlockSpec((tm, 1), row_block),    # actor ids
                pl.BlockSpec((tm, 1), row_block),    # actor mask
                pl.BlockSpec((tm, 1), row_block),    # critic ids
                pl.BlockSpec((tm, 1), row_block),    # critic mask
                _VMEM_WHOLE,                         # actor  E@W1  (Va, F) bf16
                _VMEM_WHOLE,                         # actor  b1    (1, F)  f32
                _VMEM_WHOLE,                         # actor  W2    (F, Va) bf16
                _VMEM_WHOLE,                         # actor  b2    (1, Va) f32
                _VMEM_WHOLE,                         # critic E@W1  (Vc, F) bf16
                _VMEM_WHOLE,                         # critic b1    (1, F)  f32
                _VMEM_WHOLE,                         # critic wv    (1, F)  bf16
                _SMEM_WHOLE,                         # critic bv    (1, 1)  f32
            ],
            out_specs=[
                pl.BlockSpec((tm, va), row_block),           # logits (row tiles)
                pl.BlockSpec((1, tm), lambda i: (0, i)),     # values (lane-dense)
            ],
        ),
        compiler_params=pltpu.CompilerParams(dimension_semantics=("parallel",)),
    )(ids_a, m_a, ids_c, m_c, a_ew1, a_b1, a_w2, a_b2, c_ew1, c_b1, c_wv, c_bv)

    logits = logits_p[:rows_a].reshape(ba, sa, va)
    values = values_p[0, :rows_c].reshape(bc, sc)
    # ActorCritic.forward trailing-slice semantics
    return logits[:, -action_len_actor:, :], values[:, -action_len_critic:]


# ------------------------------- model class --------------------------------

class ActorCriticPallas:
    """JAX/Pallas analogue of chatllama's ActorCritic (forward only)."""

    def __init__(self, key, *, vocab_actor=128, vocab_critic=128,
                 hidden=32, ffn=128):
        ka = jax.random.split(key, 6)
        s = 0.02
        # ---- f32 "original" parameters (kept for the pure-JAX reference) ----
        self.ref_actor_emb = s * jax.random.normal(ka[0], (vocab_actor, hidden))
        self.ref_actor_w1 = s * jax.random.normal(ka[1], (hidden, ffn))
        self.ref_actor_b1 = jnp.zeros((1, ffn), jnp.float32)
        self.ref_actor_w2 = s * jax.random.normal(ka[2], (ffn, vocab_actor))
        self.ref_actor_b2 = jnp.zeros((1, vocab_actor), jnp.float32)
        self.ref_critic_emb = s * jax.random.normal(ka[3], (vocab_critic, hidden))
        self.ref_critic_w1 = s * jax.random.normal(ka[4], (hidden, ffn))
        self.ref_critic_b1 = jnp.zeros((1, ffn), jnp.float32)
        self.ref_critic_wv = s * jax.random.normal(ka[5], (1, ffn))
        self.ref_critic_bv = jnp.zeros((1, 1), jnp.float32)

        # ---- kernel parameters: E@W1 pre-folded (f32 matmul), bf16 weights ----
        a_ew1 = (self.ref_actor_emb @ self.ref_actor_w1).astype(jnp.bfloat16)
        c_ew1 = (self.ref_critic_emb @ self.ref_critic_w1).astype(jnp.bfloat16)
        self.params = (
            a_ew1, self.ref_actor_b1,
            self.ref_actor_w2.astype(jnp.bfloat16), self.ref_actor_b2,
            c_ew1, self.ref_critic_b1,
            self.ref_critic_wv.astype(jnp.bfloat16), self.ref_critic_bv,
        )
        self.vocab_actor = vocab_actor
        self.vocab_critic = vocab_critic

    def forward(self, sequences_actor, sequences_mask_actor,
                sequences_critic, sequences_mask_critic,
                action_len_actor: int, action_len_critic: int):
        return _actor_critic_forward(
            self.params, sequences_actor, sequences_mask_actor,
            sequences_critic, sequences_mask_critic,
            action_len_actor=action_len_actor,
            action_len_critic=action_len_critic)


# ------------------------- pure-JAX reference (f32) --------------------------

def _ref_forward(model, seq_a, mask_a, seq_c, mask_c, ala, alc):
    def actor(seq, mask):
        x = model.ref_actor_emb[seq] * mask.astype(jnp.float32)[..., None]
        h = jax.nn.gelu(x @ model.ref_actor_w1 + model.ref_actor_b1, approximate=True)
        return h @ model.ref_actor_w2 + model.ref_actor_b2

    def critic(seq, mask):
        x = model.ref_critic_emb[seq] * mask.astype(jnp.float32)[..., None]
        h = jax.nn.gelu(x @ model.ref_critic_w1 + model.ref_critic_b1, approximate=True)
        return (h * model.ref_critic_wv).sum(-1) + model.ref_critic_bv[0, 0]

    logits = actor(seq_a, mask_a)[:, -ala:, :]
    values = critic(seq_c, mask_c)[:, -alc:]
    return logits, values


if __name__ == "__main__":
    key = jax.random.PRNGKey(0)
    k_model, k_a, k_c = jax.random.split(key, 3)

    B, S_actor, S_critic = 2, 8, 8
    action_len_actor, action_len_critic = 3, 3

    model = ActorCriticPallas(k_model)

    sequences_actor = jax.random.randint(k_a, (B, S_actor), 0, model.vocab_actor, jnp.int32)
    sequences_critic = jax.random.randint(k_c, (B, S_critic), 0, model.vocab_critic, jnp.int32)
    sequences_mask_actor = jnp.ones((B, S_actor), jnp.int32)
    sequences_mask_critic = jnp.ones((B, S_critic), jnp.int32)

    real_logits, real_values = model.forward(
        sequences_actor, sequences_mask_actor,
        sequences_critic, sequences_mask_critic,
        action_len_actor, action_len_critic)
    jax.block_until_ready((real_logits, real_values))

    assert real_logits.shape == (B, action_len_actor, model.vocab_actor)
    assert real_values.shape == (B, action_len_critic)

    # correctness check against a pure-JAX f32 reference (bf16 matmul / bf16
    # logits-output tolerance)
    ref_logits, ref_values = _ref_forward(
        model, sequences_actor, sequences_mask_actor,
        sequences_critic, sequences_mask_critic,
        action_len_actor, action_len_critic)
    assert bool(jnp.allclose(real_logits.astype(jnp.float32), ref_logits,
                             atol=1e-2, rtol=5e-2))
    assert bool(jnp.allclose(real_values, ref_values, atol=1e-2, rtol=5e-2))

    print("KERNEL_OK")
</pallas_src>

<mosaic_0001>
module attributes {stable_mosaic.version = 11 : i64} {
  func.func @_fused_actor_critic_kernel(%arg0: i32, %arg1: memref<16x1xi32, #tpu.memory_space<vmem>>, %arg2: memref<16x1xf32, #tpu.memory_space<vmem>>, %arg3: memref<16x1xi32, #tpu.memory_space<vmem>>, %arg4: memref<16x1xf32, #tpu.memory_space<vmem>>, %arg5: memref<128x128xbf16, #tpu.memory_space<vmem>>, %arg6: memref<1x128xf32, #tpu.memory_space<vmem>>, %arg7: memref<128x128xbf16, #tpu.memory_space<vmem>>, %arg8: memref<1x128xf32, #tpu.memory_space<vmem>>, %arg9: memref<128x128xbf16, #tpu.memory_space<vmem>>, %arg10: memref<1x128xf32, #tpu.memory_space<vmem>>, %arg11: memref<1x128xbf16, #tpu.memory_space<vmem>>, %arg12: memref<1x1xf32, #tpu.memory_space<smem>>, %arg13: memref<16x128xbf16, #tpu.memory_space<vmem>>, %arg14: memref<1x16xf32, #tpu.memory_space<vmem>>) attributes {dimension_semantics = [#tpu.dimension_semantics<parallel>], iteration_bounds = array<i64: 1>, scalar_prefetch = 0 : i64, scratch_operands = 0 : i64, tpu.core_type = #tpu.core_type<tc>, window_params = [{transform_indices = @transform_0, window_bounds = array<i64: 16, 1>}, {transform_indices = @transform_1, window_bounds = array<i64: 16, 1>}, {transform_indices = @transform_2, window_bounds = array<i64: 16, 1>}, {transform_indices = @transform_3, window_bounds = array<i64: 16, 1>}, {pipeline_mode = #tpu.pipeline_mode<synchronous>, transform_indices = @transform_4, window_bounds = array<i64: 128, 128>}, {pipeline_mode = #tpu.pipeline_mode<synchronous>, transform_indices = @transform_5, window_bounds = array<i64: 1, 128>}, {pipeline_mode = #tpu.pipeline_mode<synchronous>, transform_indices = @transform_6, window_bounds = array<i64: 128, 128>}, {pipeline_mode = #tpu.pipeline_mode<synchronous>, transform_indices = @transform_7, window_bounds = array<i64: 1, 128>}, {pipeline_mode = #tpu.pipeline_mode<synchronous>, transform_indices = @transform_8, window_bounds = array<i64: 128, 128>}, {pipeline_mode = #tpu.pipeline_mode<synchronous>, transform_indices = @transform_9, window_bounds = array<i64: 1, 128>}, {pipeline_mode = #tpu.pipeline_mode<synchronous>, transform_indices = @transform_10, window_bounds = array<i64: 1, 128>}, {transform_indices = @transform_11, window_bounds = array<i64: 1, 1>}, {transform_indices = @transform_12, window_bounds = array<i64: 16, 128>}, {transform_indices = @transform_13, window_bounds = array<i64: 1, 16>}]} {
    %0 = tpu.iota {dimensions = array<i32: 1>} : vector<16x128xi32>
    %c0 = arith.constant 0 : index
    %c0_0 = arith.constant 0 : index
    %1 = vector.load %arg1[%c0, %c0_0] : memref<16x1xi32, #tpu.memory_space<vmem>>, vector<16x1xi32>
    %2 = vector.broadcast %1 : vector<16x1xi32> to vector<16x128xi32>
    %3 = arith.cmpi eq, %2, %0 : vector<16x128xi32>
    %c0_1 = arith.constant 0 : index
    %c0_2 = arith.constant 0 : index
    %4 = vector.load %arg2[%c0_1, %c0_2] : memref<16x1xf32, #tpu.memory_space<vmem>>, vector<16x1xf32>
    %cst = arith.constant 0.000000e+00 : f32
    %5 = vector.shape_cast %4 : vector<16x1xf32> to vector<16x1xf32>
    %6 = vector.broadcast %5 : vector<16x1xf32> to vector<16x128xf32>
    %7 = vector.broadcast %cst : f32 to vector<16x128xf32>
    %8 = arith.select %3, %6, %7 : vector<16x128xi1>, vector<16x128xf32>
    %9 = arith.truncf %8 : vector<16x128xf32> to vector<16x128xbf16>
    %c0_3 = arith.constant 0 : index
    %c0_4 = arith.constant 0 : index
    %10 = vector.load %arg5[%c0_3, %c0_4] : memref<128x128xbf16, #tpu.memory_space<vmem>>, vector<128x128xbf16>
    %cst_5 = arith.constant dense<0.000000e+00> : vector<16x128xf32>
    %11 = tpu.matmul %9, %10, %cst_5 {dimension_numbers = #tpu.dot_dimension_numbers<[1], [0], [0], [1], [0, 0, 1, 1], [], []>} : vector<16x128xbf16>, vector<128x128xbf16>, vector<16x128xf32> -> vector<16x128xf32>
    %c0_6 = arith.constant 0 : index
    %c0_7 = arith.constant 0 : index
    %12 = vector.load %arg6[%c0_6, %c0_7] : memref<1x128xf32, #tpu.memory_space<vmem>>, vector<1x128xf32>
    %13 = vector.broadcast %12 : vector<1x128xf32> to vector<16x128xf32>
    %14 = arith.addf %11, %13 : vector<16x128xf32>
    %15 = arith.mulf %14, %14 : vector<16x128xf32>
    %16 = arith.mulf %14, %15 : vector<16x128xf32>
    %cst_8 = arith.constant 4.471500e-02 : f32
    %17 = vector.broadcast %cst_8 : f32 to vector<16x128xf32>
    %18 = arith.mulf %17, %16 : vector<16x128xf32>
    %19 = arith.addf %14, %18 : vector<16x128xf32>
    %cst_9 = arith.constant 0.797884583 : f32
    %20 = vector.broadcast %cst_9 : f32 to vector<16x128xf32>
    %21 = arith.mulf %20, %19 : vector<16x128xf32>
    %22 = math.tanh %21 : vector<16x128xf32>
    %cst_10 = arith.constant 1.000000e+00 : f32
    %23 = vector.broadcast %cst_10 : f32 to vector<16x128xf32>
    %24 = arith.addf %23, %22 : vector<16x128xf32>
    %cst_11 = arith.constant 5.000000e-01 : f32
    %25 = vector.broadcast %cst_11 : f32 to vector<16x128xf32>
    %26 = arith.mulf %25, %24 : vector<16x128xf32>
    %27 = arith.mulf %14, %26 : vector<16x128xf32>
    %28 = arith.truncf %27 : vector<16x128xf32> to vector<16x128xbf16>
    %c0_12 = arith.constant 0 : index
    %c0_13 = arith.constant 0 : index
    %29 = vector.load %arg7[%c0_12, %c0_13] : memref<128x128xbf16, #tpu.memory_space<vmem>>, vector<128x128xbf16>
    %cst_14 = arith.constant dense<0.000000e+00> : vector<16x128xf32>
    %30 = tpu.matmul %28, %29, %cst_14 {dimension_numbers = #tpu.dot_dimension_numbers<[1], [0], [0], [1], [0, 0, 1, 1], [], []>} : vector<16x128xbf16>, vector<128x128xbf16>, vector<16x128xf32> -> vector<16x128xf32>
    %c0_15 = arith.constant 0 : index
    %c0_16 = arith.constant 0 : index
    %31 = vector.load %arg8[%c0_15, %c0_16] : memref<1x128xf32, #tpu.memory_space<vmem>>, vector<1x128xf32>
    %32 = vector.broadcast %31 : vector<1x128xf32> to vector<16x128xf32>
    %33 = arith.addf %30, %32 : vector<16x128xf32>
    %34 = arith.truncf %33 : vector<16x128xf32> to vector<16x128xbf16>
    %c0_17 = arith.constant 0 : index
    %c0_18 = arith.constant 0 : index
    %35 = vector.load %arg13[%c0_17, %c0_18] : memref<16x128xbf16, #tpu.memory_space<vmem>>, vector<16x128xbf16>
    tpu.vector_store %arg13[%c0_17, %c0_18], %34 {strides = array<i32>} : memref<16x128xbf16, #tpu.memory_space<vmem>>, vector<16x128xbf16>,
    %36 = tpu.iota {dimensions = array<i32: 1>} : vector<16x128xi32>
    %c0_19 = arith.constant 0 : index
    %c0_20 = arith.constant 0 : index
    %37 = vector.load %arg3[%c0_19, %c0_20] : memref<16x1xi32, #tpu.memory_space<vmem>>, vector<16x1xi32>
    %38 = vector.broadcast %37 : vector<16x1xi32> to vector<16x128xi32>
    %39 = arith.cmpi eq, %38, %36 : vector<16x128xi32>
    %c0_21 = arith.constant 0 : index
    %c0_22 = arith.constant 0 : index
    %40 = vector.load %arg4[%c0_21, %c0_22] : memref<16x1xf32, #tpu.memory_space<vmem>>, vector<16x1xf32>
    %cst_23 = arith.constant 0.000000e+00 : f32
    %41 = vector.shape_cast %40 : vector<16x1xf32> to vector<16x1xf32>
    %42 = vector.broadcast %41 : vector<16x1xf32> to vector<16x128xf32>
    %43 = vector.broadcast %cst_23 : f32 to vector<16x128xf32>
    %44 = arith.select %39, %42, %43 : vector<16x128xi1>, vector<16x128xf32>
    %45 = arith.truncf %44 : vector<16x128xf32> to vector<16x128xbf16>
    %c0_24 = arith.constant 0 : index
    %c0_25 = arith.constant 0 : index
    %46 = vector.load %arg9[%c0_24, %c0_25] : memref<128x128xbf16, #tpu.memory_space<vmem>>, vector<128x128xbf16>
    %cst_26 = arith.constant dense<0.000000e+00> : vector<16x128xf32>
    %47 = tpu.matmul %45, %46, %cst_26 {dimension_numbers = #tpu.dot_dimension_numbers<[1], [0], [0], [1], [0, 0, 1, 1], [], []>} : vector<16x128xbf16>, vector<128x128xbf16>, vector<16x128xf32> -> vector<16x128xf32>
    %c0_27 = arith.constant 0 : index
    %c0_28 = arith.constant 0 : index
    %48 = vector.load %arg10[%c0_27, %c0_28] : memref<1x128xf32, #tpu.memory_space<vmem>>, vector<1x128xf32>
    %49 = vector.broadcast %48 : vector<1x128xf32> to vector<16x128xf32>
    %50 = arith.addf %47, %49 : vector<16x128xf32>
    %51 = arith.mulf %50, %50 : vector<16x128xf32>
    %52 = arith.mulf %50, %51 : vector<16x128xf32>
    %cst_29 = arith.constant 4.471500e-02 : f32
    %53 = vector.broadcast %cst_29 : f32 to vector<16x128xf32>
    %54 = arith.mulf %53, %52 : vector<16x128xf32>
    %55 = arith.addf %50, %54 : vector<16x128xf32>
    %cst_30 = arith.constant 0.797884583 : f32
    %56 = vector.broadcast %cst_30 : f32 to vector<16x128xf32>
    %57 = arith.mulf %56, %55 : vector<16x128xf32>
    %58 = math.tanh %57 : vector<16x128xf32>
    %cst_31 = arith.constant 1.000000e+00 : f32
    %59 = vector.broadcast %cst_31 : f32 to vector<16x128xf32>
    %60 = arith.addf %59, %58 : vector<16x128xf32>
    %cst_32 = arith.constant 5.000000e-01 : f32
    %61 = vector.broadcast %cst_32 : f32 to vector<16x128xf32>
    %62 = arith.mulf %61, %60 : vector<16x128xf32>
    %63 = arith.mulf %50, %62 : vector<16x128xf32>
    %c0_33 = arith.constant 0 : index
    %c0_34 = arith.constant 0 : index
    %64 = vector.load %arg11[%c0_33, %c0_34] : memref<1x128xbf16, #tpu.memory_space<vmem>>, vector<1x128xbf16>
    %65 = arith.truncf %63 : vector<16x128xf32> to vector<16x128xbf16>
    %cst_35 = arith.constant dense<0.000000e+00> : vector<1x16xf32>
    %66 = tpu.matmul %64, %65, %cst_35 {dimension_numbers = #tpu.dot_dimension_numbers<[1], [1], [0], [0], [0, 0, 1, 0], [], []>} : vector<1x128xbf16>, vector<16x128xbf16>, vector<1x16xf32> -> vector<1x16xf32>
    %c0_36 = arith.constant 0 : index
    %c0_37 = arith.constant 0 : index
    %67 = memref.load %arg12[%c0_36, %c0_37] : memref<1x1xf32, #tpu.memory_space<smem>>
    %68 = vector.broadcast %67 : f32 to vector<1x16xf32>
    %69 = arith.addf %66, %68 : vector<1x16xf32>
    %c0_38 = arith.constant 0 : index
    %c0_39 = arith.constant 0 : index
    %70 = vector.load %arg14[%c0_38, %c0_39] : memref<1x16xf32, #tpu.memory_space<vmem>>, vector<1x16xf32>
    tpu.vector_store %arg14[%c0_38, %c0_39], %69 {strides = array<i32>} : memref<1x16xf32, #tpu.memory_space<vmem>>, vector<1x16xf32>,
    return
  }
  func.func @transform_0(%arg0: i32) -> (i32, i32) {
    %c0_i32 = arith.constant 0 : i32
    %c0_i32_0 = arith.constant 0 : i32
    return %arg0, %c0_i32 : i32, i32
  }
  func.func @transform_1(%arg0: i32) -> (i32, i32) {
    %c0_i32 = arith.constant 0 : i32
    %c0_i32_0 = arith.constant 0 : i32
    return %arg0, %c0_i32 : i32, i32
  }
  func.func @transform_2(%arg0: i32) -> (i32, i32) {
    %c0_i32 = arith.constant 0 : i32
    %c0_i32_0 = arith.constant 0 : i32
    return %arg0, %c0_i32 : i32, i32
  }
  func.func @transform_3(%arg0: i32) -> (i32, i32) {
    %c0_i32 = arith.constant 0 : i32
    %c0_i32_0 = arith.constant 0 : i32
    return %arg0, %c0_i32 : i32, i32
  }
  func.func @transform_4(%arg0: i32) -> (i32, i32) {
    %c0_i32 = arith.constant 0 : i32
    %c0_i32_0 = arith.constant 0 : i32
    %c0_i32_1 = arith.constant 0 : i32
    return %c0_i32, %c0_i32_0 : i32, i32
  }
  func.func @transform_5(%arg0: i32) -> (i32, i32) {
    %c0_i32 = arith.constant 0 : i32
    %c0_i32_0 = arith.constant 0 : i32
    %c0_i32_1 = arith.constant 0 : i32
    return %c0_i32, %c0_i32_0 : i32, i32
  }
  func.func @transform_6(%arg0: i32) -> (i32, i32) {
    %c0_i32 = arith.constant 0 : i32
    %c0_i32_0 = arith.constant 0 : i32
    %c0_i32_1 = arith.constant 0 : i32
    return %c0_i32, %c0_i32_0 : i32, i32
  }
  func.func @transform_7(%arg0: i32) -> (i32, i32) {
    %c0_i32 = arith.constant 0 : i32
    %c0_i32_0 = arith.constant 0 : i32
    %c0_i32_1 = arith.constant 0 : i32
    return %c0_i32, %c0_i32_0 : i32, i32
  }
  func.func @transform_8(%arg0: i32) -> (i32, i32) {
    %c0_i32 = arith.constant 0 : i32
    %c0_i32_0 = arith.constant 0 : i32
    %c0_i32_1 = arith.constant 0 : i32
    return %c0_i32, %c0_i32_0 : i32, i32
  }
  func.func @transform_9(%arg0: i32) -> (i32, i32) {
    %c0_i32 = arith.constant 0 : i32
    %c0_i32_0 = arith.constant 0 : i32
    %c0_i32_1 = arith.constant 0 : i32
    return %c0_i32, %c0_i32_0 : i32, i32
  }
  func.func @transform_10(%arg0: i32) -> (i32, i32) {
    %c0_i32 = arith.constant 0 : i32
    %c0_i32_0 = arith.constant 0 : i32
    %c0_i32_1 = arith.constant 0 : i32
    return %c0_i32, %c0_i32_0 : i32, i32
  }
  func.func @transform_11(%arg0: i32) -> (i32, i32) {
    %c0_i32 = arith.constant 0 : i32
    %c0_i32_0 = arith.constant 0 : i32
    %c0_i32_1 = arith.constant 0 : i32
    return %c0_i32, %c0_i32_0 : i32, i32
  }
  func.func @transform_12(%arg0: i32) -> (i32, i32) {
    %c0_i32 = arith.constant 0 : i32
    %c0_i32_0 = arith.constant 0 : i32
    return %arg0, %c0_i32 : i32, i32
  }
  func.func @transform_13(%arg0: i32) -> (i32, i32) {
    %c0_i32 = arith.constant 0 : i32
    %c0_i32_0 = arith.constant 0 : i32
    return %c0_i32, %arg0 : i32, i32
  }
}

</mosaic_0001>

<llo_original>
// kernel: squeeze.1
$region0: #{squeeze.1}
  %s0 = inlined_call_operand.vmem [shape: f32[16], index: 0, kind: input, shape index: {}]
  %s1 = inlined_call_operand.vmem [shape: f32[2,8], index: 1, kind: output, shape index: {}]
  $region1: #{squeeze.1} parent=0
    #allocation0 [shape = 'u8[4096]{0}', space=vmem, size = 0x1000, scoped, tag = 'scoped mem for output reshape']
    #allocation1 [shape = 'u8[4096]{0}', space=vmem, size = 0x1000, scoped, tag = 'scoped mem for input reshape']
    %s3 = sshll.u32 1, 1
    %s4 = ssub.s32 %s3, 1
    %v5 = vld [vmem:[%s0] sm:%s4]
    %6 = vst [vmem:[#allocation1] sm:%s4] %v5
    %v7 = vld [vmem:[#allocation1] sm:$0x1]
    %vm8 = vcmask 64512
    %9 = vst.msk [vmem:[#allocation0] sm:$0x1] %vm8, %v7
    %v10 = vld [vmem:[#allocation1] sm:$0x1]
    %11 = vrot.lane.b32.xlu0 %v10, 120
    %v12 = vpop.permute.xlu0 %11
    %vm13 = vcmask 64512
    %s14 = scalar_lea.vmem [#allocation0], 1
    %15 = vst.msk [vmem:[%s14] sm:$0x1] %vm13, %v12
    %s17 = sshll.u32 1, 2
    %s18 = ssub.s32 %s17, 1
    %v20 = vld [vmem:[#allocation0] sm:%s18]
    %s21 = sshll.u32 1, 2
    %s22 = ssub.s32 %s21, 1
    %23 = vst [vmem:[%s1] sm:%s22] %v20

// kernel: _actor_critic_forward.1
$region0: #{_actor_critic_forward.1}
  #allocation0 [shape = 'u32[]', space=smem, size = 0x4, offset = 0x4, fixed_abs, tag = 'smem constant byte address 0x4 - core index']
  #allocation1 [shape = 'u32[144,128]{1,0:T(1,128)}', space=vmem, size = 0x12000, scoped, tag = 'internal scratch']
  #allocation2 [shape = 'f32[1,1]{1,0:T(1,128)S(6)}', space=smem, size = 0x200, scoped, tag = 'scoped memory for _actor_critic_forward.1']
  %s0 = inlined_call_operand.vmem [shape: s32[16,1], index: 0, kind: input, shape index: {}]
  %s1 = inlined_call_operand.vmem [shape: f32[16,1], index: 1, kind: input, shape index: {}]
  %s2 = inlined_call_operand.vmem [shape: s32[16,1], index: 2, kind: input, shape index: {}]
  %s3 = inlined_call_operand.vmem [shape: f32[16,1], index: 3, kind: input, shape index: {}]
  %s4 = inlined_call_operand.vmem [shape: bf16[128,128], index: 4, kind: input, shape index: {}]
  %s5 = inlined_call_operand.vmem [shape: f32[1,128], index: 5, kind: input, shape index: {}]
  %s6 = inlined_call_operand.hbm [shape: bf16[128,128], index: 6, kind: input, shape index: {}]
  %s7 = inlined_call_operand.vmem [shape: f32[1,128], index: 7, kind: input, shape index: {}]
  %s8 = inlined_call_operand.hbm [shape: bf16[128,128], index: 8, kind: input, shape index: {}]
  %s9 = inlined_call_operand.vmem [shape: f32[1,128], index: 9, kind: input, shape index: {}]
  %s10 = inlined_call_operand.vmem [shape: bf16[1,128], index: 10, kind: input, shape index: {}]
  %s11 = inlined_call_operand.<no memory space> [shape: f32[1,1], index: 11, kind: input, shape index: {}]
  %s12 = inlined_call_operand.vmem [shape: bf16[16,128], index: 12, kind: output, shape index: {0}]
  %s13 = inlined_call_operand.vmem [shape: f32[1,16], index: 13, kind: output, shape index: {1}]
  %14 = xla_tuple %s12, %s13
  %s15 = sld [smem:[#allocation0]]
  $region74: #{_actor_critic_forward.1} parent=0
    _
  %s17 = ssub.s32 1, %s15
  %s18 = scalar_select 0, %s17, %s15
  %19 = sst [smem:[#allocation2]] %s11
  $region1: #{_actor_critic_forward.1} parent=0
    #allocation3 [shape = 'u8[32768]{0}', space=vmem, size = 0x8000, scoped, tag = 'input window, operand 6, single buffered']
    #allocation4 [shape = 's32[1]{0}', space=sflag, size = 0x4, scoped, tag = 'scoped memory for _actor_critic_forward.1']
    #allocation5 [shape = 'u8[32768]{0}', space=vmem, size = 0x8000, scoped, tag = 'input window, operand 8, single buffered']
    #allocation6 [shape = 's32[1]{0}', space=sflag, size = 0x4, scoped, tag = 'scoped memory for _actor_critic_forward.1']
    %20 = vsyncpa [#allocation4], 0
    %21 = vsyncpa [#allocation6], 0
    // Predicated region
    $region2: #{_actor_critic_forward.1} parent=1 // pred_check
      _
    $region3: #{_actor_critic_forward.1} parent=1 // pred_check_branch
      %23 = sbr.rel (0) target = $region5
    $region4: #{_actor_critic_forward.1} parent=1 // pred_region
      _
    $region5: #{_actor_critic_forward.1} parent=1 // pred_fallthru
      _
    // Predicated region
    $region6: #{_actor_critic_forward.1} parent=1 // pred_check
      _
    $region7: #{_actor_critic_forward.1} parent=1 // pred_check_branch
      %25 = sbr.rel (0) target = $region9
    $region8: #{_actor_critic_forward.1} parent=1 // pred_region
      _
    $region9: #{_actor_critic_forward.1} parent=1 // pred_fallthru
      _
    // Predicated region
    $region10: #{_actor_critic_forward.1} parent=1 // pred_check
      _
    $region11: #{_actor_critic_forward.1} parent=1 // pred_check_branch
      %27 = sbr.rel (0) target = $region13
    $region12: #{_actor_critic_forward.1} parent=1 // pred_region
      _
    $region13: #{_actor_critic_forward.1} parent=1 // pred_fallthru
      _
    // Predicated region
    $region14: #{_actor_critic_forward.1} parent=1 // pred_check
      _
    $region15: #{_actor_critic_forward.1} parent=1 // pred_check_branch
      %29 = sbr.rel (0) target = $region17
    $region16: #{_actor_critic_forward.1} parent=1 // pred_region
      _
    $region17: #{_actor_critic_forward.1} parent=1 // pred_fallthru
      _
    // Predicated region
    $region18: #{_actor_critic_forward.1} parent=1 // pred_check
      _
    $region19: #{_actor_critic_forward.1} parent=1 // pred_check_branch
      %31 = sbr.rel (0) target = $region21
    $region20: #{_actor_critic_forward.1} parent=1 // pred_region
      _
    $region21: #{_actor_critic_forward.1} parent=1 // pred_fallthru
      _
    // Predicated region
    $region22: #{_actor_critic_forward.1} parent=1 // pred_check
      _
    $region23: #{_actor_critic_forward.1} parent=1 // pred_check_branch
      %33 = sbr.rel (0) target = $region25
    $region24: #{_actor_critic_forward.1} parent=1 // pred_region
      _
    $region25: #{_actor_critic_forward.1} parent=1 // pred_fallthru
      _
    // Predicated region
    $region26: #{_actor_critic_forward.1} parent=1 // pred_check
      _
    $region27: #{_actor_critic_forward.1} parent=1 // pred_check_branch
      %35 = sbr.rel (0) target = $region29
    $region28: #{_actor_critic_forward.1} parent=1 // pred_region
      %s37 = ssub.s32 1024, 1024
      %38 = vsyncadd [#allocation4], %s37
      %s39 = sshll.u32 [#allocation3], 4
      %s40 = int_to_ptr.vmem [resolvable:$true] %s39
      %45 = dma.hbm_to_vmem [thread:$0]  %s6, 1024, %s40, [#allocation4], 64, 64, 4
    $region29: #{_actor_critic_forward.1} parent=1 // pred_fallthru
      _
    // Predicated region
    $region30: #{_actor_critic_forward.1} parent=1 // pred_check
      _
    $region31: #{_actor_critic_forward.1} parent=1 // pred_check_branch
      %47 = sbr.rel (0) target = $region33
    $region32: #{_actor_critic_forward.1} parent=1 // pred_region
      _
    $region33: #{_actor_critic_forward.1} parent=1 // pred_fallthru
      _
    // Predicated region
    $region34: #{_actor_critic_forward.1} parent=1 // pred_check
      _
    $region35: #{_actor_critic_forward.1} parent=1 // pred_check_branch
      %49 = sbr.rel (0) target = $region37
    $region36: #{_actor_critic_forward.1} parent=1 // pred_region
      %s51 = ssub.s32 1024, 1024
      %52 = vsyncadd [#allocation6], %s51
      %s53 = sshll.u32 [#allocation5], 4
      %s54 = int_to_ptr.vmem [resolvable:$true] %s53
      %59 = dma.hbm_to_vmem [thread:$0]  %s8, 1024, %s54, [#allocation6], 64, 64, 4
    $region37: #{_actor_critic_forward.1} parent=1 // pred_fallthru
      _
    // Predicated region
    $region38: #{_actor_critic_forward.1} parent=1 // pred_check
      _
    $region39: #{_actor_critic_forward.1} parent=1 // pred_check_branch
      %61 = sbr.rel (0) target = $region41
    $region40: #{_actor_critic_forward.1} parent=1 // pred_region
      _
    $region41: #{_actor_critic_forward.1} parent=1 // pred_fallthru
      _
    // Predicated region
    $region42: #{_actor_critic_forward.1} parent=1 // pred_check
      _
    $region43: #{_actor_critic_forward.1} parent=1 // pred_check_branch
      %63 = sbr.rel (0) target = $region45
    $region44: #{_actor_critic_forward.1} parent=1 // pred_region
      _
    $region45: #{_actor_critic_forward.1} parent=1 // pred_fallthru
      _
    // Predicated region
    $region46: #{_actor_critic_forward.1} parent=1 // pred_check
      _
    $region47: #{_actor_critic_forward.1} parent=1 // pred_check_branch
      %65 = sbr.rel (0) target = $region49
    $region48: #{_actor_critic_forward.1} parent=1 // pred_region
      _
    $region49: #{_actor_critic_forward.1} parent=1 // pred_fallthru
      _
    // Predicated region
    $region50: #{_actor_critic_forward.1} parent=1 // pred_check
      _
    $region51: #{_actor_critic_forward.1} parent=1 // pred_check_branch
      %67 = sbr.rel (0) target = $region53
    $region52: #{_actor_critic_forward.1} parent=1 // pred_region
      %68 = dma.done [#allocation4], 1024
    $region53: #{_actor_critic_forward.1} parent=1 // pred_fallthru
      _
    // Predicated region
    $region54: #{_actor_critic_forward.1} parent=1 // pred_check
      _
    $region55: #{_actor_critic_forward.1} parent=1 // pred_check_branch
      %70 = sbr.rel (0) target = $region57
    $region56: #{_actor_critic_forward.1} parent=1 // pred_region
      %71 = dma.done [#allocation6], 1024
    $region57: #{_actor_critic_forward.1} parent=1 // pred_fallthru
      _
    %v73 = vlaneseq
    %v74 = vand.u32 %v73, 127
    %v75 = vld [vmem:[%s0] sm:$0xff]
    %v76 = vld [vmem:[%s0 + $0x8] sm:$0xff]
    %77 = vset.pattern.permute.xlu0 0
    %78 = vperm.xlu0 %77, %v75
    %v79 = vpop.permute.xlu0 %78
    %80 = vset.pattern.permute.xlu0 0
    %81 = vperm.xlu0 %80, %v76
    %v82 = vpop.permute.xlu0 %81
    %vm83 = vcmp.eq.s32.totalorder %v79, %v74
    %vm84 = vcmp.eq.s32.totalorder %v82, %v74
    %v85 = vld [vmem:[%s1] sm:$0xff]
    %v86 = vld [vmem:[%s1 + $0x8] sm:$0xff]
    %88 = vset.pattern.permute.xlu0 0
    %89 = vperm.xlu0 %88, %v85
    %v90 = vpop.permute.xlu0 %89
    %93 = vset.pattern.permute.xlu0 0
    %94 = vperm.xlu0 %93, %v86
    %v95 = vpop.permute.xlu0 %94
    %v97 = vsel %vm83, %v90, 0.0
    %v98 = vsel %vm84, %v95, 0.0
    %v99 = vpack.c.bf16 %v98, %v97
    %v100 = vld [vmem:[%s4] sm:$0xf]
    %v101 = vld [vmem:[%s4 + $0x4] sm:$0xf]
    %v102 = vld [vmem:[%s4 + $0x8] sm:$0xf]
    %v103 = vld [vmem:[%s4 + $0xc] sm:$0xf]
    %v104 = vld [vmem:[%s4 + $0x10] sm:$0xf]
    %v105 = vld [vmem:[%s4 + $0x14] sm:$0xf]
    %v106 = vld [vmem:[%s4 + $0x18] sm:$0xf]
    %v107 = vld [vmem:[%s4 + $0x1c] sm:$0xf]
    %v108 = vld [vmem:[%s4 + $0x20] sm:$0xf]
    %v109 = vld [vmem:[%s4 + $0x24] sm:$0xf]
    %v110 = vld [vmem:[%s4 + $0x28] sm:$0xf]
    %v111 = vld [vmem:[%s4 + $0x2c] sm:$0xf]
    %v112 = vld [vmem:[%s4 + $0x30] sm:$0xf]
    %v113 = vld [vmem:[%s4 + $0x34] sm:$0xf]
    %v114 = vld [vmem:[%s4 + $0x38] sm:$0xf]
    %v115 = vld [vmem:[%s4 + $0x3c] sm:$0xf]
    %v116 = vld [vmem:[%s5] sm:$0x1]
    %v118 = vlaneseq
    %v119 = vshrl.u32 %v118, 7
    %v120 = vsub.s32 0, %v119
    %v121 = vrot.slane %v116, %v120
    %v139 = vunpack.c.l.b16 %v100
    %v140 = vunpack.c.l.b16 %v101
    %v141 = vunpack.c.l.b16 %v102
    %v142 = vunpack.c.l.b16 %v103
    %v143 = vunpack.c.l.b16 %v104
    %v144 = vunpack.c.l.b16 %v105
    %v145 = vunpack.c.l.b16 %v106
    %v146 = vunpack.c.l.b16 %v107
    %v147 = vunpack.c.l.b16 %v108
    %v148 = vunpack.c.l.b16 %v109
    %v149 = vunpack.c.l.b16 %v110
    %v150 = vunpack.c.l.b16 %v111
    %v151 = vunpack.c.l.b16 %v112
    %v152 = vunpack.c.l.b16 %v113
    %v153 = vunpack.c.l.b16 %v114
    %v154 = vunpack.c.l.b16 %v115
    %v155 = vpack.c.b16 %v140, %v139
    %v156 = vpack.c.b16 %v142, %v141
    %v157 = vpack.c.b16 %v144, %v143
    %v158 = vpack.c.b16 %v146, %v145
    %v159 = vpack.c.b16 %v148, %v147
    %v160 = vpack.c.b16 %v150, %v149
    %v161 = vpack.c.b16 %v152, %v151
    %v162 = vpack.c.b16 %v154, %v153
    %171 = vmatprep.subr.bf16.mxu0 0
    %172 = vmatpush1.bf16.msra.mxu0 %v162
    %173 = vmatprep.subr.bf16.mxu0 0
    %174 = vmatpush1.bf16.msra.mxu0 %v161
    %175 = vmatprep.subr.bf16.mxu0 0
    %176 = vmatpush1.bf16.msra.mxu0 %v160
    %177 = vmatprep.subr.bf16.mxu0 0
    %178 = vmatpush1.bf16.msra.mxu0 %v159
    %179 = vmatprep.subr.bf16.mxu0 0
    %180 = vmatpush1.bf16.msra.mxu0 %v158
    %181 = vmatprep.subr.bf16.mxu0 0
    %182 = vmatpush1.bf16.msra.mxu0 %v157
    %183 = vmatprep.subr.bf16.mxu0 0
    %184 = vmatpush1.bf16.msra.mxu0 %v156
    %185 = vmatprep.subr.bf16.mxu0 0
    %186 = vmatpush1.bf16.msra.mxu0 %v155
    %187 = vmatprep.subr.bf16.mxu0 0
    %188 = vmatpush2.bf16.msra.mxu0 0
    %189 = vmatprep.subr.bf16.mxu0 0
    %190 = vmatpush2.bf16.msra.mxu0 0
    %191 = vmatprep.subr.bf16.mxu0 0
    %192 = vmatpush2.bf16.msra.mxu0 0
    %193 = vmatprep.subr.bf16.mxu0 0
    %194 = vmatpush2.bf16.msra.mxu0 0
    %195 = vmatprep.subr.bf16.mxu0 0
    %196 = vmatpush2.bf16.msra.mxu0 0
    %197 = vmatprep.subr.bf16.mxu0 0
    %198 = vmatpush2.bf16.msra.mxu0 0
    %199 = vmatprep.subr.bf16.mxu0 0
    %200 = vmatpush2.bf16.msra.mxu0 0
    %201 = vmatprep.subr.bf16.mxu0 0
    %202 = vmatpush2.bf16.msra.mxu0 0
    %203 = vmatprep.mubr.bf16.mxu0 0
    %204 = vmatmul.mubr.bf16.gmra.mxu0 %v99
    %v205 = vpop.f32.mrf.mxu0
    %v206 = vadd.f32 %v121, %v205
    %v207 = vpop.f32.mrf.mxu0
    %v208 = vpop.f32.mrf.mxu0
    %v209 = vadd.f32 %v121, %v208
    %v210 = vpop.f32.mrf.mxu0
    %211 = vdwg.mxu0
    %v212 = vmul.f32 %v206, %v206
    %v213 = vmul.f32 %v209, %v209
    %v214 = vmul.f32 %v206, %v212
    %v215 = vmul.f32 %v209, %v213
    %v216 = vmul.f32 %v214, 0.044715
    %v217 = vmul.f32 %v215, 0.044715
    %v218 = vadd.f32 %v206, %v216
    %v219 = vadd.f32 %v209, %v217
    %v220 = vmul.f32 %v218, 0.7978846
    %v221 = vmul.f32 %v219, 0.7978846
    %v222 = vtanh.pop %v220
    %v223 = vtanh.pop %v221
    %v224 = vadd.f32 %v222, 1.0
    %v225 = vadd.f32 %v223, 1.0
    %v226 = vmul.f32 %v224, 0.5
    %v227 = vmul.f32 %v225, 0.5
    %v228 = vmul.f32 %v206, %v226
    %v229 = vmul.f32 %v209, %v227
    %v230 = vpack.c.bf16 %v229, %v228
    %v231 = vld [vmem:[#allocation3] sm:$0xf]
    %v232 = vld [vmem:[#allocation3 + $0x4] sm:$0xf]
    %v233 = vld [vmem:[#allocation3 + $0x8] sm:$0xf]
    %v234 = vld [vmem:[#allocation3 + $0xc] sm:$0xf]
    %v235 = vld [vmem:[#allocation3 + $0x10] sm:$0xf]
    %v236 = vld [vmem:[#allocation3 + $0x14] sm:$0xf]
    %v237 = vld [vmem:[#allocation3 + $0x18] sm:$0xf]
    %v238 = vld [vmem:[#allocation3 + $0x1c] sm:$0xf]
    %v239 = vld [vmem:[#allocation3 + $0x20] sm:$0xf]
    %v240 = vld [vmem:[#allocation3 + $0x24] sm:$0xf]
    %v241 = vld [vmem:[#allocation3 + $0x28] sm:$0xf]
    %v242 = vld [vmem:[#allocation3 + $0x2c] sm:$0xf]
    %v243 = vld [vmem:[#allocation3 + $0x30] sm:$0xf]
    %v244 = vld [vmem:[#allocation3 + $0x34] sm:$0xf]
    %v245 = vld [vmem:[#allocation3 + $0x38] sm:$0xf]
    %v246 = vld [vmem:[#allocation3 + $0x3c] sm:$0xf]
    %v247 = vld [vmem:[%s7] sm:$0x1]
    %v249 = vlaneseq
    %v250 = vshrl.u32 %v249, 7
    %v251 = vsub.s32 0, %v250
    %v252 = vrot.slane %v247, %v251
    %v270 = vunpack.c.l.b16 %v231
    %v271 = vunpack.c.l.b16 %v232
    %v272 = vunpack.c.l.b16 %v233
    %v273 = vunpack.c.l.b16 %v234
    %v274 = vunpack.c.l.b16 %v235
    %v275 = vunpack.c.l.b16 %v236
    %v276 = vunpack.c.l.b16 %v237
    %v277 = vunpack.c.l.b16 %v238
    %v278 = vunpack.c.l.b16 %v239
    %v279 = vunpack.c.l.b16 %v240
    %v280 = vunpack.c.l.b16 %v241
    %v281 = vunpack.c.l.b16 %v242
    %v282 = vunpack.c.l.b16 %v243
    %v283 = vunpack.c.l.b16 %v244
    %v284 = vunpack.c.l.b16 %v245
    %v285 = vunpack.c.l.b16 %v246
    %v286 = vpack.c.b16 %v271, %v270
    %v287 = vpack.c.b16 %v273, %v272
    %v288 = vpack.c.b16 %v275, %v274
    %v289 = vpack.c.b16 %v277, %v276
    %v290 = vpack.c.b16 %v279, %v278
    %v291 = vpack.c.b16 %v281, %v280
    %v292 = vpack.c.b16 %v283, %v282
    %v293 = vpack.c.b16 %v285, %v284
    %302 = vmatprep.subr.bf16.mxu0 0
    %303 = vmatpush1.bf16.msra.mxu0 %v293
    %304 = vmatprep.subr.bf16.mxu0 0
    %305 = vmatpush1.bf16.msra.mxu0 %v292
    %306 = vmatprep.subr.bf16.mxu0 0
    %307 = vmatpush1.bf16.msra.mxu0 %v291
    %308 = vmatprep.subr.bf16.mxu0 0
    %309 = vmatpush1.bf16.msra.mxu0 %v290
    %310 = vmatprep.subr.bf16.mxu0 0
    %311 = vmatpush1.bf16.msra.mxu0 %v289
    %312 = vmatprep.subr.bf16.mxu0 0
    %313 = vmatpush1.bf16.msra.mxu0 %v288
    %314 = vmatprep.subr.bf16.mxu0 0
    %315 = vmatpush1.bf16.msra.mxu0 %v287
    %316 = vmatprep.subr.bf16.mxu0 0
    %317 = vmatpush1.bf16.msra.mxu0 %v286
    %318 = vmatprep.subr.bf16.mxu0 0
    %319 = vmatpush2.bf16.msra.mxu0 0
    %320 = vmatprep.subr.bf16.mxu0 0
    %321 = vmatpush2.bf16.msra.mxu0 0
    %322 = vmatprep.subr.bf16.mxu0 0
    %323 = vmatpush2.bf16.msra.mxu0 0
    %324 = vmatprep.subr.bf16.mxu0 0
    %325 = vmatpush2.bf16.msra.mxu0 0
    %326 = vmatprep.subr.bf16.mxu0 0
    %327 = vmatpush2.bf16.msra.mxu0 0
    %328 = vmatprep.subr.bf16.mxu0 0
    %329 = vmatpush2.bf16.msra.mxu0 0
    %330 = vmatprep.subr.bf16.mxu0 0
    %331 = vmatpush2.bf16.msra.mxu0 0
    %332 = vmatprep.subr.bf16.mxu0 0
    %333 = vmatpush2.bf16.msra.mxu0 0
    %334 = vmatprep.mubr.bf16.mxu0 0
    %335 = vmatmul.mubr.bf16.gmra.mxu0 %v230
    %v336 = vpop.f32.mrf.mxu0
    %v337 = vadd.f32 %v252, %v336
    %v338 = vpop.f32.mrf.mxu0
    %v339 = vpop.f32.mrf.mxu0
    %v340 = vadd.f32 %v252, %v339
    %v341 = vpop.f32.mrf.mxu0
    %342 = vdwg.mxu0
    %v343 = vpack.c.bf16 %v340, %v337
    %v345 = vunpack.c.l.b16 %v343
    %v346 = vunpack.c.h.b16 %v343
    %v347 = vpack.c.b16 %v345, %v345
    %v348 = vpack.c.b16 %v346, %v346
    %351 = vst [vmem:[%s12] sm:$0xf] %v347
    %352 = vst [vmem:[%s12 + $0x4] sm:$0xf] %v348
    %v353 = vld [vmem:[%s2] sm:$0xff]
    %v354 = vld [vmem:[%s2 + $0x8] sm:$0xff]
    %355 = vset.pattern.permute.xlu0 0
    %356 = vperm.xlu0 %355, %v353
    %v357 = vpop.permute.xlu0 %356
    %358 = vset.pattern.permute.xlu0 0
    %359 = vperm.xlu0 %358, %v354
    %v360 = vpop.permute.xlu0 %359
    %vm361 = vcmp.eq.s32.totalorder %v357, %v74
    %vm362 = vcmp.eq.s32.totalorder %v360, %v74
    %v363 = vld [vmem:[%s3] sm:$0xff]
    %v364 = vld [vmem:[%s3 + $0x8] sm:$0xff]
    %366 = vset.pattern.permute.xlu0 0
    %367 = vperm.xlu0 %366, %v363
    %v368 = vpop.permute.xlu0 %367
    %371 = vset.pattern.permute.xlu0 0
    %372 = vperm.xlu0 %371, %v364
    %v373 = vpop.permute.xlu0 %372
    %v375 = vsel %vm361, %v368, 0.0
    %v376 = vsel %vm362, %v373, 0.0
    %v377 = vpack.c.bf16 %v376, %v375
    %v378 = vld [vmem:[#allocation5] sm:$0xf]
    %v379 = vld [vmem:[#allocation5 + $0x4] sm:$0xf]
    %v380 = vld [vmem:[#allocation5 + $0x8] sm:$0xf]
    %v381 = vld [vmem:[#allocation5 + $0xc] sm:$0xf]
    %v382 = vld [vmem:[#allocation5 + $0x10] sm:$0xf]
    %v383 = vld [vmem:[#allocation5 + $0x14] sm:$0xf]
    %v384 = vld [vmem:[#allocation5 + $0x18] sm:$0xf]
    %v385 = vld [vmem:[#allocation5 + $0x1c] sm:$0xf]
    %v386 = vld [vmem:[#allocation5 + $0x20] sm:$0xf]
    %v387 = vld [vmem:[#allocation5 + $0x24] sm:$0xf]
    %v388 = vld [vmem:[#allocation5 + $0x28] sm:$0xf]
    %v389 = vld [vmem:[#allocation5 + $0x2c] sm:$0xf]
    %v390 = vld [vmem:[#allocation5 + $0x30] sm:$0xf]
    %v391 = vld [vmem:[#allocation5 + $0x34] sm:$0xf]
    %v392 = vld [vmem:[#allocation5 + $0x38] sm:$0xf]
    %v393 = vld [vmem:[#allocation5 + $0x3c] sm:$0xf]
    %v394 = vld [vmem:[%s9] sm:$0x1]
    %v396 = vlaneseq
    %v397 = vshrl.u32 %v396, 7
    %v398 = vsub.s32 0, %v397
    %v399 = vrot.slane %v394, %v398
    %v417 = vunpack.c.l.b16 %v378
    %v418 = vunpack.c.l.b16 %v379
    %v419 = vunpack.c.l.b16 %v380
    %v420 = vunpack.c.l.b16 %v381
    %v421 = vunpack.c.l.b16 %v382
    %v422 = vunpack.c.l.b16 %v383
    %v423 = vunpack.c.l.b16 %v384
    %v424 = vunpack.c.l.b16 %v385
    %v425 = vunpack.c.l.b16 %v386
    %v426 = vunpack.c.l.b16 %v387
    %v427 = vunpack.c.l.b16 %v388
    %v428 = vunpack.c.l.b16 %v389
    %v429 = vunpack.c.l.b16 %v390
    %v430 = vunpack.c.l.b16 %v391
    %v431 = vunpack.c.l.b16 %v392
    %v432 = vunpack.c.l.b16 %v393
    %v433 = vpack.c.b16 %v418, %v417
    %v434 = vpack.c.b16 %v420, %v419
    %v435 = vpack.c.b16 %v422, %v421
    %v436 = vpack.c.b16 %v424, %v423
    %v437 = vpack.c.b16 %v426, %v425
    %v438 = vpack.c.b16 %v428, %v427
    %v439 = vpack.c.b16 %v430, %v429
    %v440 = vpack.c.b16 %v432, %v431
    %449 = vmatprep.subr.bf16.mxu0 0
    %450 = vmatpush1.bf16.msra.mxu0 %v440
    %451 = vmatprep.subr.bf16.mxu0 0
    %452 = vmatpush1.bf16.msra.mxu0 %v439
    %453 = vmatprep.subr.bf16.mxu0 0
    %454 = vmatpush1.bf16.msra.mxu0 %v438
    %455 = vmatprep.subr.bf16.mxu0 0
    %456 = vmatpush1.bf16.msra.mxu0 %v437
    %457 = vmatprep.subr.bf16.mxu0 0
    %458 = vmatpush1.bf16.msra.mxu0 %v436
    %459 = vmatprep.subr.bf16.mxu0 0
    %460 = vmatpush1.bf16.msra.mxu0 %v435
    %461 = vmatprep.subr.bf16.mxu0 0
    %462 = vmatpush1.bf16.msra.mxu0 %v434
    %463 = vmatprep.subr.bf16.mxu0 0
    %464 = vmatpush1.bf16.msra.mxu0 %v433
    %465 = vmatprep.subr.bf16.mxu0 0
    %466 = vmatpush2.bf16.msra.mxu0 0
    %467 = vmatprep.subr.bf16.mxu0 0
    %468 = vmatpush2.bf16.msra.mxu0 0
    %469 = vmatprep.subr.bf16.mxu0 0
    %470 = vmatpush2.bf16.msra.mxu0 0
    %471 = vmatprep.subr.bf16.mxu0 0
    %472 = vmatpush2.bf16.msra.mxu0 0
    %473 = vmatprep.subr.bf16.mxu0 0
    %474 = vmatpush2.bf16.msra.mxu0 0
    %475 = vmatprep.subr.bf16.mxu0 0
    %476 = vmatpush2.bf16.msra.mxu0 0
    %477 = vmatprep.subr.bf16.mxu0 0
    %478 = vmatpush2.bf16.msra.mxu0 0
    %479 = vmatprep.subr.bf16.mxu0 0
    %480 = vmatpush2.bf16.msra.mxu0 0
    %481 = vmatprep.mubr.bf16.mxu0 0
    %482 = vmatmul.mubr.bf16.gmra.mxu0 %v377
    %v483 = vpop.f32.mrf.mxu0
    %v484 = vadd.f32 %v399, %v483
    %v485 = vpop.f32.mrf.mxu0
    %v486 = vpop.f32.mrf.mxu0
    %v487 = vadd.f32 %v399, %v486
    %v488 = vpop.f32.mrf.mxu0
    %489 = vdwg.mxu0
    %v490 = vmul.f32 %v484, %v484
    %v491 = vmul.f32 %v487, %v487
    %v492 = vmul.f32 %v484, %v490
    %v493 = vmul.f32 %v487, %v491
    %v494 = vmul.f32 %v492, 0.044715
    %v495 = vmul.f32 %v493, 0.044715
    %v496 = vadd.f32 %v484, %v494
    %v497 = vadd.f32 %v487, %v495
    %v498 = vmul.f32 %v496, 0.7978846
    %v499 = vmul.f32 %v497, 0.7978846
    %v500 = vtanh.pop %v498
    %v501 = vtanh.pop %v499
    %v502 = vadd.f32 %v500, 1.0
    %v503 = vadd.f32 %v501, 1.0
    %v504 = vmul.f32 %v502, 0.5
    %v505 = vmul.f32 %v503, 0.5
    %v506 = vmul.f32 %v484, %v504
    %v507 = vmul.f32 %v487, %v505
    %v508 = vld [vmem:[%s10] sm:$0x1]
    %v509 = vpack.c.bf16 %v507, %v506
    %s510 = sld [smem:[#allocation2]]
    %v511 = vstv %s510
    %512 = vmatprep.subr.bf16.mxu0 0
    %513 = vmatpush1.bf16.xpose.msra.mxu0 0
    %514 = vmatprep.subr.bf16.mxu0 0
    %515 = vmatpush1.bf16.xpose.msra.mxu0 0
    %516 = vmatprep.subr.bf16.mxu0 0
    %517 = vmatpush1.bf16.xpose.msra.mxu0 0
    %518 = vmatprep.subr.bf16.mxu0 0
    %519 = vmatpush1.bf16.xpose.msra.mxu0 0
    %520 = vmatprep.subr.bf16.mxu0 0
    %521 = vmatpush1.bf16.xpose.msra.mxu0 0
    %522 = vmatprep.subr.bf16.mxu0 0
    %523 = vmatpush1.bf16.xpose.msra.mxu0 0
    %524 = vmatprep.subr.bf16.mxu0 0
    %525 = vmatpush1.bf16.xpose.msra.mxu0 0
    %526 = vmatprep.subr.bf16.mxu0 0
    %527 = vmatpush1.bf16.xpose.msra.mxu0 %v509
    %528 = vmatprep.subr.bf16.mxu0 0
    %529 = vmatpush2.bf16.xpose.msra.mxu0 0
    %530 = vmatprep.subr.bf16.mxu0 0
    %531 = vmatpush2.bf16.xpose.msra.mxu0 0
    %532 = vmatprep.subr.bf16.mxu0 0
    %533 = vmatpush2.bf16.xpose.msra.mxu0 0
    %534 = vmatprep.subr.bf16.mxu0 0
    %535 = vmatpush2.bf16.xpose.msra.mxu0 0
    %536 = vmatprep.subr.bf16.mxu0 0
    %537 = vmatpush2.bf16.xpose.msra.mxu0 0
    %538 = vmatprep.subr.bf16.mxu0 0
    %539 = vmatpush2.bf16.xpose.msra.mxu0 0
    %540 = vmatprep.subr.bf16.mxu0 0
    %541 = vmatpush2.bf16.xpose.msra.mxu0 0
    %542 = vmatprep.subr.bf16.mxu0 0
    %543 = vmatpush2.bf16.xpose.msra.mxu0 0
    %544 = vmatprep.mubr.bf16.mxu0 0
    %545 = vmatmul.mubr.bf16.gmra.mxu0 %v508
    %v546 = vpop.f32.mrf.mxu0
    %v547 = vadd.f32 %v511, %v546
    %v548 = vpop.f32.mrf.mxu0
    %v549 = vpop.f32.mrf.mxu0
    %v550 = vpop.f32.mrf.mxu0
    %551 = vdwg.mxu0
    %vm552 = vcmask 122880
    %553 = vst.msk [vmem:[%s13] sm:$0x1] %vm552, %v547
    // Predicated region
    $region58: #{_actor_critic_forward.1} parent=1 // pred_check
      _
    $region59: #{_actor_critic_forward.1} parent=1 // pred_check_branch
      %555 = sbr.rel (0) target = $region61
    $region60: #{_actor_critic_forward.1} parent=1 // pred_region
      _
    $region61: #{_actor_critic_forward.1} parent=1 // pred_fallthru
      _
    // Predicated region
    $region62: #{_actor_critic_forward.1} parent=1 // pred_check
      _
    $region63: #{_actor_critic_forward.1} parent=1 // pred_check_branch
      %557 = sbr.rel (0) target = $region65
    $region64: #{_actor_critic_forward.1} parent=1 // pred_region
      _
    $region65: #{_actor_critic_forward.1} parent=1 // pred_fallthru
      _
    // Predicated region
    $region66: #{_actor_critic_forward.1} parent=1 // pred_check
      _
    $region67: #{_actor_critic_forward.1} parent=1 // pred_check_branch
      %559 = sbr.rel (0) target = $region69
    $region68: #{_actor_critic_forward.1} parent=1 // pred_region
      _
    $region69: #{_actor_critic_forward.1} parent=1 // pred_fallthru
      _
    // Predicated region
    $region70: #{_actor_critic_forward.1} parent=1 // pred_check
      _
    $region71: #{_actor_critic_forward.1} parent=1 // pred_check_branch
      %561 = sbr.rel (0) target = $region73
    $region72: #{_actor_critic_forward.1} parent=1 // pred_region
      _
    $region73: #{_actor_critic_forward.1} parent=1 // pred_fallthru
      _
    %562 = vsyncpa [#allocation4], 1
    %563 = vsyncpa [#allocation6], 1

</llo_original>
